<compile_context>
chip_gen: v6e
topology: v6e:2x2x1
jax: 0.10.0
libtpu: 0.0.40
codegen_flags: <defaults>
</compile_context>

<pallas_src>
import jax
import jax.numpy as jnp
from jax.experimental import pallas as pl
from jax.experimental.pallas import tpu as pltpu

IN_FEATURES = 384
N_LABEL = 40
TM_DEFAULT = 4096        # 4096 * 384 * 4 B = 6 MiB per x buffer
SMALL_N_FASTPATH = 1024  # below this, a plain XLA GEMV beats kernel launch overhead
VMEM_LIMIT_BYTES = 32 << 20


def _round_up(x, m):
    return ((x + m - 1) // m) * m


def _linear_kernel(x_ref, w_ref, b_ref, o_ref):
    # x tile: (tm, 384) f32; w: (384, n_label) f32 (VMEM-resident); b: (1, n_label).
    y = jnp.dot(x_ref[...], w_ref[...], preferred_element_type=jnp.float32)
    o_ref[...] = (y + b_ref[...]).astype(o_ref.dtype)


def prepare_params(weight, bias):
    """One-time parameter prep (hoisted out of the per-call path).

    weight: (n_label, 384) PyTorch layout -> (384, n_label) f32 (pre-transposed).
    bias:   (n_label,)                    -> (1, n_label)   f32.
    """
    w_t = jnp.asarray(weight, jnp.float32).T          # (384, n_label)
    b2d = jnp.asarray(bias, jnp.float32)[None, :]     # (1, n_label)
    return w_t, b2d


def linear_classifier_msg3d(x, w_t, b2d, *, use_pallas=None):
    """Pallas equivalent of nn.Linear(384, n_label) forward: y = x @ W.T + b.

    Args:
      x:   (N, 384) float32 activations.
      w_t: (384, n_label) float32 pre-transposed weight (from prepare_params).
      b2d: (1, n_label)   float32 bias (from prepare_params).
      use_pallas: force/skip the Pallas path; default = auto (N >= SMALL_N_FASTPATH).
    Returns:
      (N, n_label) float32 logits.
    """
    n, f = x.shape
    assert f == IN_FEATURES
    n_label = w_t.shape[1]

    if use_pallas is None:
        use_pallas = n >= SMALL_N_FASTPATH
    if not use_pallas:
        # Tiny batches: kernel launch + single-step pipeline overhead dominates.
        return jnp.dot(x, w_t, preferred_element_type=jnp.float32) + b2d[0]

    # Row tile: as large as possible (amortize per-step overhead) but keep >= 2
    # tiles so v7x's two TensorCores both get work via the "parallel" axis.
    tm = max(8, min(TM_DEFAULT, _round_up(pl.cdiv(n, 2), 8)))
    grid = (pl.cdiv(n, tm),)   # partial tail tile handled by Pallas (masked stores)

    cost = pl.CostEstimate(
        flops=2 * n * f * n_label,
        transcendentals=0,
        bytes_accessed=(n * f * 4              # x read
                        + w_t.size * 4         # weight read
                        + b2d.size * 4         # bias read
                        + n * n_label * 4),    # logits write
    )

    out = pl.pallas_call(
        _linear_kernel,
        out_shape=jax.ShapeDtypeStruct((n, n_label), jnp.float32),
        grid_spec=pl.GridSpec(
            grid=grid,
            in_specs=[
                pl.BlockSpec((tm, f), lambda i: (i, 0)),            # x: tiled over rows
                pl.BlockSpec((f, n_label), lambda i: (0, 0)),       # weight: VMEM-resident
                pl.BlockSpec((1, n_label), lambda i: (0, 0)),       # bias:   VMEM-resident
            ],
            out_specs=pl.BlockSpec((tm, n_label), lambda i: (i, 0)),
        ),
        compiler_params=pltpu.CompilerParams(
            dimension_semantics=("parallel",),
            vmem_limit_bytes=VMEM_LIMIT_BYTES,
        ),
        cost_estimate=cost,
    )(x, w_t, b2d)

    return out


def _reference(x, weight, bias):
    return x @ weight.T + bias


if __name__ == "__main__":
    key = jax.random.PRNGKey(0)
    k_x1, k_x2, k_w, k_b = jax.random.split(key, 4)

    # Deterministic parameter init (mimics nn.Linear's uniform(-1/sqrt(fan_in), ..) scale).
    bound = 1.0 / (IN_FEATURES ** 0.5)
    weight = jax.random.uniform(
        k_w, (N_LABEL, IN_FEATURES), minval=-bound, maxval=bound, dtype=jnp.float32
    )
    bias = jax.random.uniform(
        k_b, (N_LABEL,), minval=-bound, maxval=bound, dtype=jnp.float32
    )

    # One-time param prep (transpose), hoisted out of the call path.
    w_t, b2d = prepare_params(weight, bias)

    # 1) Pallas path: a modest batch that is NOT a multiple of the tile (exercises
    #    the cdiv grid + masked tail writeback).
    n_pallas = 264
    x_pallas = jax.random.normal(k_x1, (n_pallas, IN_FEATURES), dtype=jnp.float32)
    y_pallas = linear_classifier_msg3d(x_pallas, w_t, b2d, use_pallas=True)
    y_pallas = jax.block_until_ready(y_pallas)
    y_ref = _reference(x_pallas, weight, bias)
    assert y_pallas.shape == (n_pallas, N_LABEL)
    # MXU matmul (f32 in, f32 acc) vs fp32 reference: comfortable tolerance.
    assert jnp.allclose(y_pallas, y_ref, atol=2e-2, rtol=2e-2), "pallas path mismatch"

    # 2) Small-N fast path (auto): tiny batch goes through plain XLA dot.
    n_small = 8
    x_small = jax.random.normal(k_x2, (n_small, IN_FEATURES), dtype=jnp.float32)
    y_small = jax.block_until_ready(linear_classifier_msg3d(x_small, w_t, b2d))
    y_small_ref = _reference(x_small, weight, bias)
    assert y_small.shape == (n_small, N_LABEL)
    assert jnp.allclose(y_small, y_small_ref, atol=2e-2, rtol=2e-2), "fast path mismatch"

    print("KERNEL_OK")
</pallas_src>

<mosaic_0001>
module attributes {stable_mosaic.version = 11 : i64} {
  func.func @_linear_kernel(%arg0: i32, %arg1: memref<136x384xf32, #tpu.memory_space<vmem>>, %arg2: memref<384x40xf32, #tpu.memory_space<vmem>>, %arg3: memref<1x40xf32, #tpu.memory_space<vmem>>, %arg4: memref<136x40xf32, #tpu.memory_space<vmem>>) attributes {dimension_semantics = [#tpu.dimension_semantics<parallel>], iteration_bounds = array<i64: 2>, scalar_prefetch = 0 : i64, scratch_operands = 0 : i64, tpu.core_type = #tpu.core_type<tc>, window_params = [{transform_indices = @transform_0, window_bounds = array<i64: 136, 384>}, {pipeline_mode = #tpu.pipeline_mode<synchronous>, transform_indices = @transform_1, window_bounds = array<i64: 384, 40>}, {pipeline_mode = #tpu.pipeline_mode<synchronous>, transform_indices = @transform_2, window_bounds = array<i64: 1, 40>}, {transform_indices = @transform_3, window_bounds = array<i64: 136, 40>}]} {
    %c0 = arith.constant 0 : index
    %c0_0 = arith.constant 0 : index
    %0 = vector.load %arg1[%c0, %c0_0] : memref<136x384xf32, #tpu.memory_space<vmem>>, vector<136x384xf32>
    %c0_1 = arith.constant 0 : index
    %c0_2 = arith.constant 0 : index
    %1 = vector.load %arg2[%c0_1, %c0_2] : memref<384x40xf32, #tpu.memory_space<vmem>>, vector<384x40xf32>
    %cst = arith.constant dense<0.000000e+00> : vector<136x40xf32>
    %2 = tpu.matmul %0, %1, %cst {dimension_numbers = #tpu.dot_dimension_numbers<[1], [0], [0], [1], [0, 0, 1, 1], [], []>} : vector<136x384xf32>, vector<384x40xf32>, vector<136x40xf32> -> vector<136x40xf32>
    %c0_3 = arith.constant 0 : index
    %c0_4 = arith.constant 0 : index
    %3 = vector.load %arg3[%c0_3, %c0_4] : memref<1x40xf32, #tpu.memory_space<vmem>>, vector<1x40xf32>
    %4 = vector.broadcast %3 : vector<1x40xf32> to vector<136x40xf32>
    %5 = arith.addf %2, %4 : vector<136x40xf32>
    %c0_5 = arith.constant 0 : index
    %c0_6 = arith.constant 0 : index
    %6 = vector.load %arg4[%c0_5, %c0_6] : memref<136x40xf32, #tpu.memory_space<vmem>>, vector<136x40xf32>
    tpu.vector_store %arg4[%c0_5, %c0_6], %5 {strides = array<i32>} : memref<136x40xf32, #tpu.memory_space<vmem>>, vector<136x40xf32>,
    return
  }
  func.func @transform_0(%arg0: i32) -> (i32, i32) {
    %c0_i32 = arith.constant 0 : i32
    %c0_i32_0 = arith.constant 0 : i32
    return %arg0, %c0_i32 : i32, i32
  }
  func.func @transform_1(%arg0: i32) -> (i32, i32) {
    %c0_i32 = arith.constant 0 : i32
    %c0_i32_0 = arith.constant 0 : i32
    %c0_i32_1 = arith.constant 0 : i32
    return %c0_i32, %c0_i32_0 : i32, i32
  }
  func.func @transform_2(%arg0: i32) -> (i32, i32) {
    %c0_i32 = arith.constant 0 : i32
    %c0_i32_0 = arith.constant 0 : i32
    %c0_i32_1 = arith.constant 0 : i32
    return %c0_i32, %c0_i32_0 : i32, i32
  }
  func.func @transform_3(%arg0: i32) -> (i32, i32) {
    %c0_i32 = arith.constant 0 : i32
    %c0_i32_0 = arith.constant 0 : i32
    return %arg0, %c0_i32 : i32, i32
  }
}

</mosaic_0001>

<llo_original>
// kernel: tpu_custom_call.1
$region0: #{tpu_custom_call.1}
  #allocation0 [shape = 'u32[]', space=smem, size = 0x4, offset = 0x4, fixed_abs, tag = 'smem constant byte address 0x4 - core index']
  #allocation1 [shape = 'u32[144,128]{1,0:T(1,128)}', space=vmem, size = 0x12000, scoped, tag = 'internal scratch']
  %s0 = inlined_call_operand.hbm [shape: f32[264,384], index: 0, kind: input, shape index: {}]
  %s1 = inlined_call_operand.vmem [shape: f32[384,40], index: 1, kind: input, shape index: {}]
  %s2 = inlined_call_operand.vmem [shape: f32[1,40], index: 2, kind: input, shape index: {}]
  %s3 = inlined_call_operand.vmem [shape: f32[264,40], index: 3, kind: output, shape index: {}]
  %s4 = sld [smem:[#allocation0]]
  $region97: #{tpu_custom_call.1} parent=0
    _
  %s6 = ssub.s32 1, %s4
  %s7 = scalar_select 0, %s6, %s4
  $region1: #{tpu_custom_call.1} parent=0
    #allocation2 [shape = 'u8[417792]{0}', space=vmem, size = 0x66000, scoped, tag = 'input window, operand 0']
    #allocation3 [shape = 's32[2]{0}', space=sflag, size = 0x8, scoped, tag = 'scoped memory for tpu_custom_call.1']
    #allocation4 [shape = 'u8[139264]{0}', space=vmem, size = 0x22000, scoped, tag = 'output window, operand 0']
    %8 = vsyncpa [#allocation3], 0
    %s9 = scalar_lea.sflag [#allocation3], 1
    %10 = vsyncpa %s9, 0
    loop: start=0, step=1, limit=4
    $region2: #{tpu_custom_call.1} parent=1 // loop_pre_header
      _
    $region3: #{tpu_custom_call.1} parent=1 // loop_header
      %s12 = sphi 0, %s16
      %p13 = scmp.ge.s32.totalorder %s12, 4
      %s22 = sphi 0, %s24
      %s25 = sphi 0, %s22
      %s26 = sphi 0, %s25
      %s42 = sphi 0, %s26
      %s46 = sphi 0, %s46
      %s48 = sphi 0, %s46
      %s49 = sphi 0, %s48
      %s63 = sphi 0, %s49
      %s67 = sphi 0, %s67
      %s69 = sphi 0, %s67
      %s70 = sphi 0, %s69
      %s84 = sphi 0, %s70
      %s90 = sphi 0, %s92
      %s93 = sphi 0, %s90
      %s94 = sphi 0, %s93
      %s110 = sphi 0, %s94
    $region4: #{tpu_custom_call.1} parent=1 // loop_header_branch
      %15 = sbr.rel (%p13) target = $region8
    $region5: #{tpu_custom_call.1} parent=1 // loop_body
      %s17 = ssub.s32 %s12, 1
      %s18 = ssub.s32 %s12, 2
      %s19 = sadd.s32 %s12, 1
      %s20 = ssub.s32 %s12, %s19
      %p21 = scmp.eq.s32.totalorder %s20, 0
      %s23 = sadd.s32 %s22, 1
      %s24 = scalar_select %p21, %s22, %s23
      %p27 = pneg %p21
      %p28 = scmp.eq.s32.totalorder %s12, 1
      %p29 = por %p27, %p28
      %p30 = scmp.ne.s32.totalorder %s22, %s25
      %p31 = scmp.eq.s32.totalorder %s12, 0
      %p32 = por %p30, %p31
      %p33 = scmp.ne.s32.totalorder %s22, %s25
      %p34 = scmp.eq.s32.totalorder %s17, 1
      %p35 = por %p33, %p34
      %p36 = scmp.ne.s32.totalorder %s25, %s26
      %p37 = scmp.eq.s32.totalorder %s17, 0
      %p38 = por %p36, %p37
      %p39 = scmp.ne.s32.totalorder %s25, %s26
      %p40 = scmp.eq.s32.totalorder %s18, 1
      %p41 = por %p39, %p40
      %p43 = scmp.ne.s32.totalorder %s26, %s42
      %p44 = scmp.eq.s32.totalorder %s18, 0
      %p45 = por %p43, %p44
      %s47 = sadd.s32 %s46, 1
      %p50 = scmp.eq.s32.totalorder %s12, 1
      %p51 = scmp.ne.s32.totalorder %s46, %s48
      %p52 = scmp.eq.s32.totalorder %s12, 0
      %p53 = por %p51, %p52
      %p54 = scmp.ne.s32.totalorder %s46, %s48
      %p55 = scmp.eq.s32.totalorder %s17, 1
      %p56 = por %p54, %p55
      %p57 = scmp.ne.s32.totalorder %s48, %s49
      %p58 = scmp.eq.s32.totalorder %s17, 0
      %p59 = por %p57, %p58
      %p60 = scmp.ne.s32.totalorder %s48, %s49
      %p61 = scmp.eq.s32.totalorder %s18, 1
      %p62 = por %p60, %p61
      %p64 = scmp.ne.s32.totalorder %s49, %s63
      %p65 = scmp.eq.s32.totalorder %s18, 0
      %p66 = por %p64, %p65
      %s68 = sadd.s32 %s67, 1
      %p71 = scmp.eq.s32.totalorder %s12, 1
      %p72 = scmp.ne.s32.totalorder %s67, %s69
      %p73 = scmp.eq.s32.totalorder %s12, 0
      %p74 = por %p72, %p73
      %p75 = scmp.ne.s32.totalorder %s67, %s69
      %p76 = scmp.eq.s32.totalorder %s17, 1
      %p77 = por %p75, %p76
      %p78 = scmp.ne.s32.totalorder %s69, %s70
      %p79 = scmp.eq.s32.totalorder %s17, 0
      %p80 = por %p78, %p79
      %p81 = scmp.ne.s32.totalorder %s69, %s70
      %p82 = scmp.eq.s32.totalorder %s18, 1
      %p83 = por %p81, %p82
      %p85 = scmp.ne.s32.totalorder %s70, %s84
      %p86 = scmp.eq.s32.totalorder %s18, 0
      %p87 = por %p85, %p86
      %s88 = ssub.s32 %s12, %s19
      %p89 = scmp.eq.s32.totalorder %s88, 0
      %s91 = sadd.s32 %s90, 1
      %s92 = scalar_select %p89, %s90, %s91
      %p95 = pneg %p89
      %p96 = scmp.eq.s32.totalorder %s12, 1
      %p97 = por %p95, %p96
      %p98 = scmp.ne.s32.totalorder %s90, %s93
      %p99 = scmp.eq.s32.totalorder %s12, 0
      %p100 = por %p98, %p99
      %p101 = scmp.ne.s32.totalorder %s90, %s93
      %p102 = scmp.eq.s32.totalorder %s17, 1
      %p103 = por %p101, %p102
      %p104 = scmp.ne.s32.totalorder %s93, %s94
      %p105 = scmp.eq.s32.totalorder %s17, 0
      %p106 = por %p104, %p105
      %p107 = scmp.ne.s32.totalorder %s93, %s94
      %p108 = scmp.eq.s32.totalorder %s18, 1
      %p109 = por %p107, %p108
      %p111 = scmp.ne.s32.totalorder %s94, %s110
      %p112 = scmp.eq.s32.totalorder %s18, 0
      %p113 = por %p111, %p112
      %p114 = scmp.le.s32.totalorder 1, %s12
      %p115 = scmp.lt.s32.totalorder %s12, 3
      %p116 = pnand %p114, %p115
      %p117 = pneg %p116
      // Predicated region
      $region9: #{tpu_custom_call.1} parent=5 // pred_check
        _
      $region10: #{tpu_custom_call.1} parent=5 // pred_check_branch
        %119 = sbr.rel (%p116) target = $region12
      $region11: #{tpu_custom_call.1} parent=5 // pred_region
        %s120 = ssub.s32 %s12, 1
        // Predicated region
        $region13: #{tpu_custom_call.1} parent=11 // pred_check
          %p121 = pneg %p59
        $region14: #{tpu_custom_call.1} parent=11 // pred_check_branch
          %123 = sbr.rel (%p121) target = $region16
        $region15: #{tpu_custom_call.1} parent=11 // pred_region
          _
        $region16: #{tpu_custom_call.1} parent=11 // pred_fallthru
          _
        // Predicated region
        $region17: #{tpu_custom_call.1} parent=11 // pred_check
          %p124 = pneg %p80
        $region18: #{tpu_custom_call.1} parent=11 // pred_check_branch
          %126 = sbr.rel (%p124) target = $region20
        $region19: #{tpu_custom_call.1} parent=11 // pred_region
          _
        $region20: #{tpu_custom_call.1} parent=11 // pred_fallthru
          _
      $region12: #{tpu_custom_call.1} parent=5 // pred_fallthru
        _
      %p127 = scmp.lt.s32.totalorder %s12, 2
      // Predicated region
      $region21: #{tpu_custom_call.1} parent=5 // pred_check
        %p128 = pneg %p127
      $region22: #{tpu_custom_call.1} parent=5 // pred_check_branch
        %130 = sbr.rel (%p128) target = $region24
      $region23: #{tpu_custom_call.1} parent=5 // pred_region
        // Predicated region
        $region25: #{tpu_custom_call.1} parent=23 // pred_check
          %p131 = pneg %p32
        $region26: #{tpu_custom_call.1} parent=23 // pred_check_branch
          %133 = sbr.rel (%p131) target = $region28
        $region27: #{tpu_custom_call.1} parent=23 // pred_region
          %s134 = sand.u32 %s22, 1
          %s135 = scalar_lea.sflag [#allocation3], %s134
          %s136 = sand.u32 %s22, 1
          %s137 = smul.addr %s136, 408
          %s138 = scalar_lea.vmem [#allocation2], %s137
          %s139 = smul.u32 17, %s12
          %s140 = ssub.s32 33, %s139
          %p141 = scmp.lt.s32.totalorder %s140, 17
          %s142 = scalar_select %p141, %s140, 17
          %s143 = smul.u32 128, %s142
          %s144 = smul.u32 %s143, 3
          %s146 = ssub.s32 6528, %s144
          %147 = vsyncadd %s135, %s146
          %p148 = scmp.ne.s32.totalorder 0, %s144
          %s149 = smul.addr %s139, 3
          %s150 = smul.addr %s149, 128
          %s151 = scalar_lea.hbm %s0, %s150
          %s152 = smul.u32 24, %s142
          %s153 = sshll.u32 %s138, 4
          %s154 = int_to_ptr.vmem [resolvable:$true] %s153
          %s155 = sshll.u32 %s152, 4
          %159 = dma.hbm_to_vmem [thread:$0]  (%p148), %s151, %s155, %s154, %s135, 384, 384, 24
        $region28: #{tpu_custom_call.1} parent=23 // pred_fallthru
          _
      $region24: #{tpu_custom_call.1} parent=5 // pred_fallthru
        _
      %p160 = scmp.le.s32.totalorder 1, %s12
      %p161 = scmp.lt.s32.totalorder %s12, 3
      %p162 = pnand %p160, %p161
      %p163 = pneg %p162
      // Predicated region
      $region29: #{tpu_custom_call.1} parent=5 // pred_check
        _
      $region30: #{tpu_custom_call.1} parent=5 // pred_check_branch
        %165 = sbr.rel (%p162) target = $region32
      $region31: #{tpu_custom_call.1} parent=5 // pred_region
        %s166 = ssub.s32 %s12, 1
        %s167 = sand.u32 %s25, 1
        %s168 = scalar_lea.sflag [#allocation3], %s167
        %s169 = sand.u32 %s25, 1
        %s170 = smul.addr %s169, 408
        %s171 = scalar_lea.vmem [#allocation2], %s170
        // Predicated region
        $region33: #{tpu_custom_call.1} parent=31 // pred_check
          %p172 = pneg %p38
        $region34: #{tpu_custom_call.1} parent=31 // pred_check_branch
          %174 = sbr.rel (%p172) target = $region36
        $region35: #{tpu_custom_call.1} parent=31 // pred_region
          %175 = dma.done %s168, 6528
        $region36: #{tpu_custom_call.1} parent=31 // pred_fallthru
          _
        %s176 = sand.u32 %s25, 1
        %s177 = scalar_lea.sflag [#allocation3], %s176
        %s178 = sand.u32 %s25, 1
        %s179 = smul.addr %s178, 408
        %s180 = scalar_lea.vmem [#allocation2], %s179
        %p181 = pneg %p38
        %p182 = pneg %p35
        %p183 = pneg %p59
        %p184 = pneg %p56
        %p185 = pneg %p80
        %p186 = pneg %p77
        %p187 = pneg %p106
        %p188 = pneg %p103
        %s189 = sand.u32 %s93, 1
        %s190 = sand.u32 %s93, 1
        %s191 = smul.addr %s190, 136
        %s192 = scalar_lea.vmem [#allocation4], %s191
        %s193 = smul.u32 17, %s17
        %s194 = ssub.s32 33, %s193
        %p195 = scmp.lt.s32.totalorder %s194, 17
        %s196 = scalar_select %p195, %s194, 17
        %s197 = smul.u32 128, %s196
        %s198 = smul.u32 %s197, 3
        %s199 = smul.u32 17, %s17
        %s200 = ssub.s32 33, %s199
        %p201 = scmp.lt.s32.totalorder %s200, 17
        %s202 = scalar_select %p201, %s200, 17
        %s203 = smul.u32 128, %s202
        %v204 = vld [vmem:[%s171] sm:$0xff]
        %v205 = vld [vmem:[%s171 + $0x8] sm:$0xff]
        %v206 = vld [vmem:[%s171 + $0x10] sm:$0xff]
        %v207 = vld [vmem:[%s171 + $0x18] sm:$0xff]
        %v208 = vld [vmem:[%s171 + $0x20] sm:$0xff]
        %v209 = vld [vmem:[%s171 + $0x28] sm:$0xff]
        %v210 = vld [vmem:[%s171 + $0x30] sm:$0xff]
        %v211 = vld [vmem:[%s171 + $0x38] sm:$0xff]
        %v212 = vld [vmem:[%s171 + $0x40] sm:$0xff]
        %v213 = vld [vmem:[%s171 + $0x48] sm:$0xff]
        %v214 = vld [vmem:[%s171 + $0x50] sm:$0xff]
        %v215 = vld [vmem:[%s171 + $0x58] sm:$0xff]
        %v216 = vld [vmem:[%s171 + $0x60] sm:$0xff]
        %v217 = vld [vmem:[%s171 + $0x68] sm:$0xff]
        %v218 = vld [vmem:[%s171 + $0x70] sm:$0xff]
        %v219 = vld [vmem:[%s171 + $0x78] sm:$0xff]
        %v220 = vld [vmem:[%s171 + $0x80] sm:$0xff]
        %v221 = vld [vmem:[%s171 + $0x88] sm:$0xff]
        %v222 = vld [vmem:[%s171 + $0x90] sm:$0xff]
        %v223 = vld [vmem:[%s171 + $0x98] sm:$0xff]
        %v224 = vld [vmem:[%s171 + $0xa0] sm:$0xff]
        %v225 = vld [vmem:[%s171 + $0xa8] sm:$0xff]
        %v226 = vld [vmem:[%s171 + $0xb0] sm:$0xff]
        %v227 = vld [vmem:[%s171 + $0xb8] sm:$0xff]
        %v228 = vld [vmem:[%s171 + $0xc0] sm:$0xff]
        %v229 = vld [vmem:[%s171 + $0xc8] sm:$0xff]
        %v230 = vld [vmem:[%s171 + $0xd0] sm:$0xff]
        %v231 = vld [vmem:[%s171 + $0xd8] sm:$0xff]
        %v232 = vld [vmem:[%s171 + $0xe0] sm:$0xff]
        %v233 = vld [vmem:[%s171 + $0xe8] sm:$0xff]
        %v234 = vld [vmem:[%s171 + $0xf0] sm:$0xff]
        %v235 = vld [vmem:[%s171 + $0xf8] sm:$0xff]
        %v236 = vld [vmem:[%s171 + $0x100] sm:$0xff]
        %v237 = vld [vmem:[%s171 + $0x108] sm:$0xff]
        %v238 = vld [vmem:[%s171 + $0x110] sm:$0xff]
        %v239 = vld [vmem:[%s171 + $0x118] sm:$0xff]
        %v240 = vld [vmem:[%s171 + $0x120] sm:$0xff]
        %v241 = vld [vmem:[%s171 + $0x128] sm:$0xff]
        %v242 = vld [vmem:[%s171 + $0x130] sm:$0xff]
        %v243 = vld [vmem:[%s171 + $0x138] sm:$0xff]
        %v244 = vld [vmem:[%s171 + $0x140] sm:$0xff]
        %v245 = vld [vmem:[%s171 + $0x148] sm:$0xff]
        %v246 = vld [vmem:[%s171 + $0x150] sm:$0xff]
        %v247 = vld [vmem:[%s171 + $0x158] sm:$0xff]
        %v248 = vld [vmem:[%s171 + $0x160] sm:$0xff]
        %v249 = vld [vmem:[%s171 + $0x168] sm:$0xff]
        %v250 = vld [vmem:[%s171 + $0x170] sm:$0xff]
        %v251 = vld [vmem:[%s171 + $0x178] sm:$0xff]
        %v252 = vld [vmem:[%s171 + $0x180] sm:$0xff]
        %v253 = vld [vmem:[%s171 + $0x188] sm:$0xff]
        %v254 = vld [vmem:[%s171 + $0x190] sm:$0xff]
        %v255 = vld [vmem:[%s1] sm:$0xff]
        %v256 = vld [vmem:[%s1 + $0x8] sm:$0xff]
        %v257 = vld [vmem:[%s1 + $0x10] sm:$0xff]
        %v258 = vld [vmem:[%s1 + $0x18] sm:$0xff]
        %v259 = vld [vmem:[%s1 + $0x20] sm:$0xff]
        %v260 = vld [vmem:[%s1 + $0x28] sm:$0xff]
        %v261 = vld [vmem:[%s1 + $0x30] sm:$0xff]
        %v262 = vld [vmem:[%s1 + $0x38] sm:$0xff]
        %v263 = vld [vmem:[%s1 + $0x40] sm:$0xff]
        %v264 = vld [vmem:[%s1 + $0x48] sm:$0xff]
        %v265 = vld [vmem:[%s1 + $0x50] sm:$0xff]
        %v266 = vld [vmem:[%s1 + $0x58] sm:$0xff]
        %v267 = vld [vmem:[%s1 + $0x60] sm:$0xff]
        %v268 = vld [vmem:[%s1 + $0x68] sm:$0xff]
        %v269 = vld [vmem:[%s1 + $0x70] sm:$0xff]
        %v270 = vld [vmem:[%s1 + $0x78] sm:$0xff]
        %v271 = vld [vmem:[%s1 + $0x80] sm:$0xff]
        %v272 = vld [vmem:[%s1 + $0x88] sm:$0xff]
        %v273 = vld [vmem:[%s1 + $0x90] sm:$0xff]
        %v274 = vld [vmem:[%s1 + $0x98] sm:$0xff]
        %v275 = vld [vmem:[%s1 + $0xa0] sm:$0xff]
        %v276 = vld [vmem:[%s1 + $0xa8] sm:$0xff]
        %v277 = vld [vmem:[%s1 + $0xb0] sm:$0xff]
        %v278 = vld [vmem:[%s1 + $0xb8] sm:$0xff]
        %v279 = vld [vmem:[%s1 + $0xc0] sm:$0xff]
        %v280 = vld [vmem:[%s1 + $0xc8] sm:$0xff]
        %v281 = vld [vmem:[%s1 + $0xd0] sm:$0xff]
        %v282 = vld [vmem:[%s1 + $0xd8] sm:$0xff]
        %v283 = vld [vmem:[%s1 + $0xe0] sm:$0xff]
        %v284 = vld [vmem:[%s1 + $0xe8] sm:$0xff]
        %v285 = vld [vmem:[%s1 + $0xf0] sm:$0xff]
        %v286 = vld [vmem:[%s1 + $0xf8] sm:$0xff]
        %v287 = vld [vmem:[%s1 + $0x100] sm:$0xff]
        %v288 = vld [vmem:[%s1 + $0x108] sm:$0xff]
        %v289 = vld [vmem:[%s1 + $0x110] sm:$0xff]
        %v290 = vld [vmem:[%s1 + $0x118] sm:$0xff]
        %v291 = vld [vmem:[%s1 + $0x120] sm:$0xff]
        %v292 = vld [vmem:[%s1 + $0x128] sm:$0xff]
        %v293 = vld [vmem:[%s1 + $0x130] sm:$0xff]
        %v294 = vld [vmem:[%s1 + $0x138] sm:$0xff]
        %v295 = vld [vmem:[%s1 + $0x140] sm:$0xff]
        %v296 = vld [vmem:[%s1 + $0x148] sm:$0xff]
        %v297 = vld [vmem:[%s1 + $0x150] sm:$0xff]
        %v298 = vld [vmem:[%s1 + $0x158] sm:$0xff]
        %v299 = vld [vmem:[%s1 + $0x160] sm:$0xff]
        %v300 = vld [vmem:[%s1 + $0x168] sm:$0xff]
        %v301 = vld [vmem:[%s1 + $0x170] sm:$0xff]
        %v302 = vld [vmem:[%s1 + $0x178] sm:$0xff]
        %v303 = vld [vmem:[%s2] sm:$0x1]
        %v305 = vlaneseq
        %v306 = vshrl.u32 %v305, 7
        %v307 = vsub.s32 0, %v306
        %v308 = vrot.slane %v303, %v307
        %310 = vmatprep.subr.mxu0 0.0
        %311 = vmatpush1.msra.mxu0 %v270
        %312 = vmatprep.subr.mxu0 0.0
        %313 = vmatpush1.msra.mxu0 %v269
        %314 = vmatprep.subr.mxu0 0.0
        %315 = vmatpush1.msra.mxu0 %v268
        %316 = vmatprep.subr.mxu0 0.0
        %317 = vmatpush1.msra.mxu0 %v267
        %318 = vmatprep.subr.mxu0 0.0
        %319 = vmatpush1.msra.mxu0 %v266
        %320 = vmatprep.subr.mxu0 0.0
        %321 = vmatpush1.msra.mxu0 %v265
        %322 = vmatprep.subr.mxu0 0.0
        %323 = vmatpush1.msra.mxu0 %v264
        %324 = vmatprep.subr.mxu0 0.0
        %325 = vmatpush1.msra.mxu0 %v263
        %326 = vmatprep.subr.mxu0 0.0
        %327 = vmatpush1.msra.mxu0 %v262
        %328 = vmatprep.subr.mxu0 0.0
        %329 = vmatpush1.msra.mxu0 %v261
        %330 = vmatprep.subr.mxu0 0.0
        %331 = vmatpush1.msra.mxu0 %v260
        %332 = vmatprep.subr.mxu0 0.0
        %333 = vmatpush1.msra.mxu0 %v259
        %334 = vmatprep.subr.mxu0 0.0
        %335 = vmatpush1.msra.mxu0 %v258
        %336 = vmatprep.subr.mxu0 0.0
        %337 = vmatpush1.msra.mxu0 %v257
        %338 = vmatprep.subr.mxu0 0.0
        %339 = vmatpush1.msra.mxu0 %v256
        %340 = vmatprep.subr.mxu0 0.0
        %341 = vmatpush1.msra.mxu0 %v255
        %342 = vmatprep.subr.mxu0 0.0
        %343 = vmatpush2.msra.mxu0 %v286
        %344 = vmatprep.subr.mxu0 0.0
        %345 = vmatpush2.msra.mxu0 %v285
        %346 = vmatprep.subr.mxu0 0.0
        %347 = vmatpush2.msra.mxu0 %v284
        %348 = vmatprep.subr.mxu0 0.0
        %349 = vmatpush2.msra.mxu0 %v283
        %350 = vmatprep.subr.mxu0 0.0
        %351 = vmatpush2.msra.mxu0 %v282
        %352 = vmatprep.subr.mxu0 0.0
        %353 = vmatpush2.msra.mxu0 %v281
        %354 = vmatprep.subr.mxu0 0.0
        %355 = vmatpush2.msra.mxu0 %v280
        %356 = vmatprep.subr.mxu0 0.0
        %357 = vmatpush2.msra.mxu0 %v279
        %358 = vmatprep.subr.mxu0 0.0
        %359 = vmatpush2.msra.mxu0 %v278
        %360 = vmatprep.subr.mxu0 0.0
        %361 = vmatpush2.msra.mxu0 %v277
        %362 = vmatprep.subr.mxu0 0.0
        %363 = vmatpush2.msra.mxu0 %v276
        %364 = vmatprep.subr.mxu0 0.0
        %365 = vmatpush2.msra.mxu0 %v275
        %366 = vmatprep.subr.mxu0 0.0
        %367 = vmatpush2.msra.mxu0 %v274
        %368 = vmatprep.subr.mxu0 0.0
        %369 = vmatpush2.msra.mxu0 %v273
        %370 = vmatprep.subr.mxu0 0.0
        %371 = vmatpush2.msra.mxu0 %v272
        %372 = vmatprep.subr.mxu0 0.0
        %373 = vmatpush2.msra.mxu0 %v271
        %374 = vmatprep.mubr.f32.mxu0 %v205
        %375 = vmatmul.mubr.f32.gmra.mxu0 %v204
        %v376 = vpop.f32.mrf.mxu0
        %v377 = vadd.f32 %v308, %v376
        %v378 = vpop.f32.mrf.mxu0
        %379 = vmatprep.mubr.f32.mxu0 %v208
        %380 = vmatmul.mubr.f32.gmra.mxu0 %v207
        %v381 = vpop.f32.mrf.mxu0
        %v382 = vadd.f32 %v308, %v381
        %v383 = vpop.f32.mrf.mxu0
        %384 = vmatprep.mubr.f32.mxu0 %v211
        %385 = vmatmul.mubr.f32.gmra.mxu0 %v210
        %v386 = vpop.f32.mrf.mxu0
        %v387 = vadd.f32 %v308, %v386
        %v388 = vpop.f32.mrf.mxu0
        %389 = vmatprep.mubr.f32.mxu0 %v214
        %390 = vmatmul.mubr.f32.gmra.mxu0 %v213
        %v391 = vpop.f32.mrf.mxu0
        %v392 = vadd.f32 %v308, %v391
        %v393 = vpop.f32.mrf.mxu0
        %394 = vmatprep.mubr.f32.mxu0 %v217
        %395 = vmatmul.mubr.f32.gmra.mxu0 %v216
        %v396 = vpop.f32.mrf.mxu0
        %v397 = vadd.f32 %v308, %v396
        %v398 = vpop.f32.mrf.mxu0
        %399 = vmatprep.mubr.f32.mxu0 %v220
        %400 = vmatmul.mubr.f32.gmra.mxu0 %v219
        %v401 = vpop.f32.mrf.mxu0
        %v402 = vadd.f32 %v308, %v401
        %v403 = vpop.f32.mrf.mxu0
        %404 = vmatprep.mubr.f32.mxu0 %v223
        %405 = vmatmul.mubr.f32.gmra.mxu0 %v222
        %v406 = vpop.f32.mrf.mxu0
        %v407 = vadd.f32 %v308, %v406
        %v408 = vpop.f32.mrf.mxu0
        %409 = vmatprep.mubr.f32.mxu0 %v226
        %410 = vmatmul.mubr.f32.gmra.mxu0 %v225
        %v411 = vpop.f32.mrf.mxu0
        %v412 = vadd.f32 %v308, %v411
        %v413 = vpop.f32.mrf.mxu0
        %414 = vmatprep.mubr.f32.mxu0 %v229
        %415 = vmatmul.mubr.f32.gmra.mxu0 %v228
        %v416 = vpop.f32.mrf.mxu0
        %v417 = vadd.f32 %v308, %v416
        %v418 = vpop.f32.mrf.mxu0
        %419 = vmatprep.mubr.f32.mxu0 %v232
        %420 = vmatmul.mubr.f32.gmra.mxu0 %v231
        %v421 = vpop.f32.mrf.mxu0
        %v422 = vadd.f32 %v308, %v421
        %v423 = vpop.f32.mrf.mxu0
        %424 = vmatprep.mubr.f32.mxu0 %v235
        %425 = vmatmul.mubr.f32.gmra.mxu0 %v234
        %v426 = vpop.f32.mrf.mxu0
        %v427 = vadd.f32 %v308, %v426
        %v428 = vpop.f32.mrf.mxu0
        %429 = vmatprep.mubr.f32.mxu0 %v238
        %430 = vmatmul.mubr.f32.gmra.mxu0 %v237
        %v431 = vpop.f32.mrf.mxu0
        %v432 = vadd.f32 %v308, %v431
        %v433 = vpop.f32.mrf.mxu0
        %434 = vmatprep.mubr.f32.mxu0 %v241
        %435 = vmatmul.mubr.f32.gmra.mxu0 %v240
        %v436 = vpop.f32.mrf.mxu0
        %v437 = vadd.f32 %v308, %v436
        %v438 = vpop.f32.mrf.mxu0
        %439 = vmatprep.mubr.f32.mxu0 %v244
        %440 = vmatmul.mubr.f32.gmra.mxu0 %v243
        %v441 = vpop.f32.mrf.mxu0
        %v442 = vadd.f32 %v308, %v441
        %v443 = vpop.f32.mrf.mxu0
        %444 = vmatprep.mubr.f32.mxu0 %v247
        %445 = vmatmul.mubr.f32.gmra.mxu0 %v246
        %v446 = vpop.f32.mrf.mxu0
        %v447 = vadd.f32 %v308, %v446
        %v448 = vpop.f32.mrf.mxu0
        %449 = vmatprep.mubr.f32.mxu0 %v250
        %450 = vmatmul.mubr.f32.gmra.mxu0 %v249
        %v451 = vpop.f32.mrf.mxu0
        %v452 = vadd.f32 %v308, %v451
        %v453 = vpop.f32.mrf.mxu0
        %454 = vmatprep.mubr.f32.mxu0 %v253
        %455 = vmatmul.mubr.f32.gmra.mxu0 %v252
        %v456 = vpop.f32.mrf.mxu0
        %v457 = vadd.f32 %v308, %v456
        %v458 = vpop.f32.mrf.mxu0
        %459 = vdwg.mxu0
        %460 = vmatprep.subr.mxu0 0.0
        %461 = vmatpush1.msra.mxu0 %v302
        %462 = vmatprep.subr.mxu0 0.0
        %463 = vmatpush1.msra.mxu0 %v301
        %464 = vmatprep.subr.mxu0 0.0
        %465 = vmatpush1.msra.mxu0 %v300
        %466 = vmatprep.subr.mxu0 0.0
        %467 = vmatpush1.msra.mxu0 %v299
        %468 = vmatprep.subr.mxu0 0.0
        %469 = vmatpush1.msra.mxu0 %v298
        %470 = vmatprep.subr.mxu0 0.0
        %471 = vmatpush1.msra.mxu0 %v297
        %472 = vmatprep.subr.mxu0 0.0
        %473 = vmatpush1.msra.mxu0 %v296
        %474 = vmatprep.subr.mxu0 0.0
        %475 = vmatpush1.msra.mxu0 %v295
        %476 = vmatprep.subr.mxu0 0.0
        %477 = vmatpush1.msra.mxu0 %v294
        %478 = vmatprep.subr.mxu0 0.0
        %479 = vmatpush1.msra.mxu0 %v293
        %480 = vmatprep.subr.mxu0 0.0
        %481 = vmatpush1.msra.mxu0 %v292
        %482 = vmatprep.subr.mxu0 0.0
        %483 = vmatpush1.msra.mxu0 %v291
        %484 = vmatprep.subr.mxu0 0.0
        %485 = vmatpush1.msra.mxu0 %v290
        %486 = vmatprep.subr.mxu0 0.0
        %487 = vmatpush1.msra.mxu0 %v289
        %488 = vmatprep.subr.mxu0 0.0
        %489 = vmatpush1.msra.mxu0 %v288
        %490 = vmatprep.subr.mxu0 0.0
        %491 = vmatpush1.msra.mxu0 %v287
        %492 = vmatprep.subr.mxu0 0.0
        %493 = vmatpush2.msra.mxu0 0.0
        %494 = vmatprep.subr.mxu0 0.0
        %495 = vmatpush2.msra.mxu0 0.0
        %496 = vmatprep.subr.mxu0 0.0
        %497 = vmatpush2.msra.mxu0 0.0
        %498 = vmatprep.subr.mxu0 0.0
        %499 = vmatpush2.msra.mxu0 0.0
        %500 = vmatprep.subr.mxu0 0.0
        %501 = vmatpush2.msra.mxu0 0.0
        %502 = vmatprep.subr.mxu0 0.0
        %503 = vmatpush2.msra.mxu0 0.0
        %504 = vmatprep.subr.mxu0 0.0
        %505 = vmatpush2.msra.mxu0 0.0
        %506 = vmatprep.subr.mxu0 0.0
        %507 = vmatpush2.msra.mxu0 0.0
        %508 = vmatprep.subr.mxu0 0.0
        %509 = vmatpush2.msra.mxu0 0.0
        %510 = vmatprep.subr.mxu0 0.0
        %511 = vmatpush2.msra.mxu0 0.0
        %512 = vmatprep.subr.mxu0 0.0
        %513 = vmatpush2.msra.mxu0 0.0
        %514 = vmatprep.subr.mxu0 0.0
        %515 = vmatpush2.msra.mxu0 0.0
        %516 = vmatprep.subr.mxu0 0.0
        %517 = vmatpush2.msra.mxu0 0.0
        %518 = vmatprep.subr.mxu0 0.0
        %519 = vmatpush2.msra.mxu0 0.0
        %520 = vmatprep.subr.mxu0 0.0
        %521 = vmatpush2.msra.mxu0 0.0
        %522 = vmatprep.subr.mxu0 0.0
        %523 = vmatpush2.msra.mxu0 0.0
        %524 = vmatprep.mubr.f32.mxu0 0.0
        %525 = vmatmul.mubr.f32.gmra.mxu0 %v206
        %v526 = vpop.f32.mrf.mxu0
        %v527 = vadd.f32 %v377, %v526
        %v528 = vpop.f32.mrf.mxu0
        %529 = vmatprep.mubr.f32.mxu0 0.0
        %530 = vmatmul.mubr.f32.gmra.mxu0 %v209
        %v531 = vpop.f32.mrf.mxu0
        %v532 = vadd.f32 %v382, %v531
        %v533 = vpop.f32.mrf.mxu0
        %534 = vmatprep.mubr.f32.mxu0 0.0
        %535 = vmatmul.mubr.f32.gmra.mxu0 %v212
        %v536 = vpop.f32.mrf.mxu0
        %v537 = vadd.f32 %v387, %v536
        %v538 = vpop.f32.mrf.mxu0
        %539 = vmatprep.mubr.f32.mxu0 0.0
        %540 = vmatmul.mubr.f32.gmra.mxu0 %v215
        %v541 = vpop.f32.mrf.mxu0
        %v542 = vadd.f32 %v392, %v541
        %v543 = vpop.f32.mrf.mxu0
        %544 = vmatprep.mubr.f32.mxu0 0.0
        %545 = vmatmul.mubr.f32.gmra.mxu0 %v218
        %v546 = vpop.f32.mrf.mxu0
        %v547 = vadd.f32 %v397, %v546
        %v548 = vpop.f32.mrf.mxu0
        %549 = vmatprep.mubr.f32.mxu0 0.0
        %550 = vmatmul.mubr.f32.gmra.mxu0 %v221
        %v551 = vpop.f32.mrf.mxu0
        %v552 = vadd.f32 %v402, %v551
        %v553 = vpop.f32.mrf.mxu0
        %554 = vmatprep.mubr.f32.mxu0 0.0
        %555 = vmatmul.mubr.f32.gmra.mxu0 %v224
        %v556 = vpop.f32.mrf.mxu0
        %v557 = vadd.f32 %v407, %v556
        %v558 = vpop.f32.mrf.mxu0
        %559 = vmatprep.mubr.f32.mxu0 0.0
        %560 = vmatmul.mubr.f32.gmra.mxu0 %v227
        %v561 = vpop.f32.mrf.mxu0
        %v562 = vadd.f32 %v412, %v561
        %v563 = vpop.f32.mrf.mxu0
        %564 = vmatprep.mubr.f32.mxu0 0.0
        %565 = vmatmul.mubr.f32.gmra.mxu0 %v230
        %v566 = vpop.f32.mrf.mxu0
        %v567 = vadd.f32 %v417, %v566
        %v568 = vpop.f32.mrf.mxu0
        %569 = vmatprep.mubr.f32.mxu0 0.0
        %570 = vmatmul.mubr.f32.gmra.mxu0 %v233
        %v571 = vpop.f32.mrf.mxu0
        %v572 = vadd.f32 %v422, %v571
        %v573 = vpop.f32.mrf.mxu0
        %574 = vmatprep.mubr.f32.mxu0 0.0
        %575 = vmatmul.mubr.f32.gmra.mxu0 %v236
        %v576 = vpop.f32.mrf.mxu0
        %v577 = vadd.f32 %v427, %v576
        %v578 = vpop.f32.mrf.mxu0
        %579 = vmatprep.mubr.f32.mxu0 0.0
        %580 = vmatmul.mubr.f32.gmra.mxu0 %v239
        %v581 = vpop.f32.mrf.mxu0
        %v582 = vadd.f32 %v432, %v581
        %v583 = vpop.f32.mrf.mxu0
        %584 = vmatprep.mubr.f32.mxu0 0.0
        %585 = vmatmul.mubr.f32.gmra.mxu0 %v242
        %v586 = vpop.f32.mrf.mxu0
        %v587 = vadd.f32 %v437, %v586
        %v588 = vpop.f32.mrf.mxu0
        %589 = vmatprep.mubr.f32.mxu0 0.0
        %590 = vmatmul.mubr.f32.gmra.mxu0 %v245
        %v591 = vpop.f32.mrf.mxu0
        %v592 = vadd.f32 %v442, %v591
        %v593 = vpop.f32.mrf.mxu0
        %594 = vmatprep.mubr.f32.mxu0 0.0
        %595 = vmatmul.mubr.f32.gmra.mxu0 %v248
        %v596 = vpop.f32.mrf.mxu0
        %v597 = vadd.f32 %v447, %v596
        %v598 = vpop.f32.mrf.mxu0
        %599 = vmatprep.mubr.f32.mxu0 0.0
        %600 = vmatmul.mubr.f32.gmra.mxu0 %v251
        %v601 = vpop.f32.mrf.mxu0
        %v602 = vadd.f32 %v452, %v601
        %v603 = vpop.f32.mrf.mxu0
        %604 = vmatprep.mubr.f32.mxu0 0.0
        %605 = vmatmul.mubr.f32.gmra.mxu0 %v254
        %v606 = vpop.f32.mrf.mxu0
        %v607 = vadd.f32 %v457, %v606
        %v608 = vpop.f32.mrf.mxu0
        %609 = vdwg.mxu0
        %vm610 = vcmask 326656
        %611 = vst.msk [vmem:[%s192] sm:$0xff] %vm610, %v527
        %612 = vst.msk [vmem:[%s192 + $0x8] sm:$0xff] %vm610, %v532
        %613 = vst.msk [vmem:[%s192 + $0x10] sm:$0xff] %vm610, %v537
        %614 = vst.msk [vmem:[%s192 + $0x18] sm:$0xff] %vm610, %v542
        %615 = vst.msk [vmem:[%s192 + $0x20] sm:$0xff] %vm610, %v547
        %616 = vst.msk [vmem:[%s192 + $0x28] sm:$0xff] %vm610, %v552
        %617 = vst.msk [vmem:[%s192 + $0x30] sm:$0xff] %vm610, %v557
        %618 = vst.msk [vmem:[%s192 + $0x38] sm:$0xff] %vm610, %v562
        %619 = vst.msk [vmem:[%s192 + $0x40] sm:$0xff] %vm610, %v567
        %620 = vst.msk [vmem:[%s192 + $0x48] sm:$0xff] %vm610, %v572
        %621 = vst.msk [vmem:[%s192 + $0x50] sm:$0xff] %vm610, %v577
        %622 = vst.msk [vmem:[%s192 + $0x58] sm:$0xff] %vm610, %v582
        %623 = vst.msk [vmem:[%s192 + $0x60] sm:$0xff] %vm610, %v587
        %624 = vst.msk [vmem:[%s192 + $0x68] sm:$0xff] %vm610, %v592
        %625 = vst.msk [vmem:[%s192 + $0x70] sm:$0xff] %vm610, %v597
        %626 = vst.msk [vmem:[%s192 + $0x78] sm:$0xff] %vm610, %v602
        %627 = vst.msk [vmem:[%s192 + $0x80] sm:$0xff] %vm610, %v607
        %s628 = sand.u32 %s93, 1
        %s629 = sand.u32 %s93, 1
        %s630 = smul.addr %s629, 136
        %s631 = scalar_lea.vmem [#allocation4], %s630
        // Predicated region
        $region37: #{tpu_custom_call.1} parent=31 // pred_check
          %p632 = pneg %p103
        $region38: #{tpu_custom_call.1} parent=31 // pred_check_branch
          %634 = sbr.rel (%p632) target = $region40
        $region39: #{tpu_custom_call.1} parent=31 // pred_region
          %s635 = smul.u32 17, %s17
          %s636 = ssub.s32 33, %s635
          %p637 = scmp.lt.s32.totalorder %s636, 17
          %s638 = scalar_select %p637, %s636, 17
          %s639 = smul.u32 128, %s638
          %p640 = scmp.ne.s32.totalorder 0, %s639
          %s641 = smul.addr %s635, 8
          %s642 = scalar_lea.vmem %s3, %s641
          // Predicated region
          $region41: #{tpu_custom_call.1} parent=39 // pred_check
            %p643 = pneg %p640
          $region42: #{tpu_custom_call.1} parent=39 // pred_check_branch
            %645 = sbr.rel (%p643) target = $region44
          $region43: #{tpu_custom_call.1} parent=39 // pred_region
            // Predicated region
            $region45: #{tpu_custom_call.1} parent=43 // pred_check
              _
            $region46: #{tpu_custom_call.1} parent=43 // pred_check_branch
              %647 = sbr.rel (0) target = $region48
            $region47: #{tpu_custom_call.1} parent=43 // pred_region
              // Predicated region
              $region67: #{tpu_custom_call.1} parent=47 // pred_check
                _
              $region68: #{tpu_custom_call.1} parent=47 // pred_check_branch
                %730 = sbr.rel (0) target = $region70
              $region69: #{tpu_custom_call.1} parent=47 // pred_region
                %s731 = sdiv.u32.pop %s638, 17
                %s732 = srem.u32.pop %s638, 17
                // While loop
                $region71: #{tpu_custom_call.1} parent=69 // loop_pre_header
                  _
                $region72: #{tpu_custom_call.1} parent=69 // loop_header
                  %s734 = sphi 0, %s736
                  %p735 = scmp.ge.s32.totalorder %s734, %s731
                  %s739 = sphi 0, %s778
                  %s740 = sphi %s631, %s781
                  %s741 = sphi %s642, %s782
                $region73: #{tpu_custom_call.1} parent=69 // loop_header_branch
                  %738 = sbr.rel (%p735) target = $region77
                $region74: #{tpu_custom_call.1} parent=69 // loop_body
                  %v742 = vld [vmem:[%s740] sm:$0xff]
                  %743 = vst [vmem:[%s741] sm:$0xff] %v742
                  %v744 = vld [vmem:[%s740 + $0x8] sm:$0xff]
                  %745 = vst [vmem:[%s741 + $0x8] sm:$0xff] %v744
                  %v746 = vld [vmem:[%s740 + $0x10] sm:$0xff]
                  %747 = vst [vmem:[%s741 + $0x10] sm:$0xff] %v746
                  %v748 = vld [vmem:[%s740 + $0x18] sm:$0xff]
                  %749 = vst [vmem:[%s741 + $0x18] sm:$0xff] %v748
                  %v750 = vld [vmem:[%s740 + $0x20] sm:$0xff]
                  %751 = vst [vmem:[%s741 + $0x20] sm:$0xff] %v750
                  %v752 = vld [vmem:[%s740 + $0x28] sm:$0xff]
                  %753 = vst [vmem:[%s741 + $0x28] sm:$0xff] %v752
                  %v754 = vld [vmem:[%s740 + $0x30] sm:$0xff]
                  %755 = vst [vmem:[%s741 + $0x30] sm:$0xff] %v754
                  %v756 = vld [vmem:[%s740 + $0x38] sm:$0xff]
                  %757 = vst [vmem:[%s741 + $0x38] sm:$0xff] %v756
                  %v758 = vld [vmem:[%s740 + $0x40] sm:$0xff]
                  %759 = vst [vmem:[%s741 + $0x40] sm:$0xff] %v758
                  %v760 = vld [vmem:[%s740 + $0x48] sm:$0xff]
                  %761 = vst [vmem:[%s741 + $0x48] sm:$0xff] %v760
                  %v762 = vld [vmem:[%s740 + $0x50] sm:$0xff]
                  %763 = vst [vmem:[%s741 + $0x50] sm:$0xff] %v762
                  %v764 = vld [vmem:[%s740 + $0x58] sm:$0xff]
                  %765 = vst [vmem:[%s741 + $0x58] sm:$0xff] %v764
                  %v766 = vld [vmem:[%s740 + $0x60] sm:$0xff]
                  %767 = vst [vmem:[%s741 + $0x60] sm:$0xff] %v766
                  %v768 = vld [vmem:[%s740 + $0x68] sm:$0xff]
                  %769 = vst [vmem:[%s741 + $0x68] sm:$0xff] %v768
                  %v770 = vld [vmem:[%s740 + $0x70] sm:$0xff]
                  %771 = vst [vmem:[%s741 + $0x70] sm:$0xff] %v770
                  %v772 = vld [vmem:[%s740 + $0x78] sm:$0xff]
                  %773 = vst [vmem:[%s741 + $0x78] sm:$0xff] %v772
                  %v774 = vld [vmem:[%s740 + $0x80] sm:$0xff]
                  %775 = vst [vmem:[%s741 + $0x80] sm:$0xff] %v774
                  %s776 = sadd.s32 1, %s739
                  %p777 = scmp.ge.s32.totalorder %s776, %s731
                  %s778 = scalar_select %p777, 0, %s776
                  %s779 = smul.u32 %s778, 136
                  %s780 = smul.u32 %s778, 136
                  %s781 = scalar_lea.vmem %s631, %s779 [#allocation4]
                  %s782 = scalar_lea.vmem %s642, %s780
                $region75: #{tpu_custom_call.1} parent=69 // loop_footer
                  %s736 = sadd.s32 %s734, 1
                $region76: #{tpu_custom_call.1} parent=69 // loop_footer_branch
                  %733 = sbr.rel target = $region72
                $region77: #{tpu_custom_call.1} parent=69 // loop_exit
                  _
                %s783 = sdiv.u32.pop %s638, 17
                %s784 = srem.u32.pop %s638, 17
                %s785 = smul.u32 %s783, 17
                %s786 = smul.u32 8, %s785
                %s787 = scalar_lea.vmem %s631, %s786 [#allocation4]
                %s788 = smul.u32 8, %s785
                %s789 = scalar_lea.vmem %s642, %s788
                // While loop
                $region78: #{tpu_custom_call.1} parent=69 // loop_pre_header
                  _
                $region79: #{tpu_custom_call.1} parent=69 // loop_header
                  %s791 = sphi 0, %s793
                  %p792 = scmp.ge.s32.totalorder %s791, %s784
                  %s796 = sphi 0, %s803
                  %s797 = sphi %s787, %s806
                  %s798 = sphi %s789, %s807
                $region80: #{tpu_custom_call.1} parent=69 // loop_header_branch
                  %795 = sbr.rel (%p792) target = $region84
                $region81: #{tpu_custom_call.1} parent=69 // loop_body
                  %v799 = vld [vmem:[%s797] sm:$0xff]
                  %800 = vst [vmem:[%s798] sm:$0xff] %v799
                  %s801 = sadd.s32 1, %s796
                  %p802 = scmp.ge.s32.totalorder %s801, %s784
                  %s803 = scalar_select %p802, 0, %s801
                  %s804 = smul.u32 %s803, 8
                  %s805 = smul.u32 %s803, 8
                  %s806 = scalar_lea.vmem %s787, %s804 [#allocation4]
                  %s807 = scalar_lea.vmem %s789, %s805
                $region82: #{tpu_custom_call.1} parent=69 // loop_footer
                  %s793 = sadd.s32 %s791, 1
                $region83: #{tpu_custom_call.1} parent=69 // loop_footer_branch
                  %790 = sbr.rel target = $region79
                $region84: #{tpu_custom_call.1} parent=69 // loop_exit
                  _
              $region70: #{tpu_custom_call.1} parent=47 // pred_fallthru
                _
              // Predicated region
              $region85: #{tpu_custom_call.1} parent=47 // pred_check
                _
              $region86: #{tpu_custom_call.1} parent=47 // pred_check_branch
                %809 = sbr.rel target = $region88
              $region87: #{tpu_custom_call.1} parent=47 // pred_region
                _
              $region88: #{tpu_custom_call.1} parent=47 // pred_fallthru
                _
            $region48: #{tpu_custom_call.1} parent=43 // pred_fallthru
              _
            // Predicated region
            $region49: #{tpu_custom_call.1} parent=43 // pred_check
              _
            $region50: #{tpu_custom_call.1} parent=43 // pred_check_branch
              %649 = sbr.rel target = $region52
            $region51: #{tpu_custom_call.1} parent=43 // pred_region
              %s651 = ssub.s32 256, 1
              %s652 = sdiv.u32.pop %s638, 17
              %s653 = srem.u32.pop %s638, 17
              // While loop
              $region53: #{tpu_custom_call.1} parent=51 // loop_pre_header
                _
              $region54: #{tpu_custom_call.1} parent=51 // loop_header
                %s655 = sphi 0, %s657
                %p656 = scmp.ge.s32.totalorder %s655, %s652
                %s660 = sphi 0, %s699
                %s661 = sphi %s631, %s702
                %s662 = sphi %s642, %s703
              $region55: #{tpu_custom_call.1} parent=51 // loop_header_branch
                %659 = sbr.rel (%p656) target = $region59
              $region56: #{tpu_custom_call.1} parent=51 // loop_body
                %v663 = vld [vmem:[%s661] sm:%s651]
                %664 = vst [vmem:[%s662] sm:%s651] %v663
                %v665 = vld [vmem:[%s661 + $0x8] sm:%s651]
                %666 = vst [vmem:[%s662 + $0x8] sm:%s651] %v665
                %v667 = vld [vmem:[%s661 + $0x10] sm:%s651]
                %668 = vst [vmem:[%s662 + $0x10] sm:%s651] %v667
                %v669 = vld [vmem:[%s661 + $0x18] sm:%s651]
                %670 = vst [vmem:[%s662 + $0x18] sm:%s651] %v669
                %v671 = vld [vmem:[%s661 + $0x20] sm:%s651]
                %672 = vst [vmem:[%s662 + $0x20] sm:%s651] %v671
                %v673 = vld [vmem:[%s661 + $0x28] sm:%s651]
                %674 = vst [vmem:[%s662 + $0x28] sm:%s651] %v673
                %v675 = vld [vmem:[%s661 + $0x30] sm:%s651]
                %676 = vst [vmem:[%s662 + $0x30] sm:%s651] %v675
                %v677 = vld [vmem:[%s661 + $0x38] sm:%s651]
                %678 = vst [vmem:[%s662 + $0x38] sm:%s651] %v677
                %v679 = vld [vmem:[%s661 + $0x40] sm:%s651]
                %680 = vst [vmem:[%s662 + $0x40] sm:%s651] %v679
                %v681 = vld [vmem:[%s661 + $0x48] sm:%s651]
                %682 = vst [vmem:[%s662 + $0x48] sm:%s651] %v681
                %v683 = vld [vmem:[%s661 + $0x50] sm:%s651]
                %684 = vst [vmem:[%s662 + $0x50] sm:%s651] %v683
                %v685 = vld [vmem:[%s661 + $0x58] sm:%s651]
                %686 = vst [vmem:[%s662 + $0x58] sm:%s651] %v685
                %v687 = vld [vmem:[%s661 + $0x60] sm:%s651]
                %688 = vst [vmem:[%s662 + $0x60] sm:%s651] %v687
                %v689 = vld [vmem:[%s661 + $0x68] sm:%s651]
                %690 = vst [vmem:[%s662 + $0x68] sm:%s651] %v689
                %v691 = vld [vmem:[%s661 + $0x70] sm:%s651]
                %692 = vst [vmem:[%s662 + $0x70] sm:%s651] %v691
                %v693 = vld [vmem:[%s661 + $0x78] sm:%s651]
                %694 = vst [vmem:[%s662 + $0x78] sm:%s651] %v693
                %v695 = vld [vmem:[%s661 + $0x80] sm:%s651]
                %696 = vst [vmem:[%s662 + $0x80] sm:%s651] %v695
                %s697 = sadd.s32 1, %s660
                %p698 = scmp.ge.s32.totalorder %s697, %s652
                %s699 = scalar_select %p698, 0, %s697
                %s700 = smul.u32 %s699, 136
                %s701 = smul.u32 %s699, 136
                %s702 = scalar_lea.vmem %s631, %s700 [#allocation4]
                %s703 = scalar_lea.vmem %s642, %s701
              $region57: #{tpu_custom_call.1} parent=51 // loop_footer
                %s657 = sadd.s32 %s655, 1
              $region58: #{tpu_custom_call.1} parent=51 // loop_footer_branch
                %654 = sbr.rel target = $region54
              $region59: #{tpu_custom_call.1} parent=51 // loop_exit
                _
              %s704 = sdiv.u32.pop %s638, 17
              %s705 = srem.u32.pop %s638, 17
              %s706 = smul.u32 %s704, 17
              %s707 = smul.u32 8, %s706
              %s708 = scalar_lea.vmem %s631, %s707 [#allocation4]
              %s709 = smul.u32 8, %s706
              %s710 = scalar_lea.vmem %s642, %s709
              // While loop
              $region60: #{tpu_custom_call.1} parent=51 // loop_pre_header
                _
              $region61: #{tpu_custom_call.1} parent=51 // loop_header
                %s712 = sphi 0, %s714
                %p713 = scmp.ge.s32.totalorder %s712, %s705
                %s717 = sphi 0, %s724
                %s718 = sphi %s708, %s727
                %s719 = sphi %s710, %s728
              $region62: #{tpu_custom_call.1} parent=51 // loop_header_branch
                %716 = sbr.rel (%p713) target = $region66
              $region63: #{tpu_custom_call.1} parent=51 // loop_body
                %v720 = vld [vmem:[%s718] sm:%s651]
                %721 = vst [vmem:[%s719] sm:%s651] %v720
                %s722 = sadd.s32 1, %s717
                %p723 = scmp.ge.s32.totalorder %s722, %s705
                %s724 = scalar_select %p723, 0, %s722
                %s725 = smul.u32 %s724, 8
                %s726 = smul.u32 %s724, 8
                %s727 = scalar_lea.vmem %s708, %s725 [#allocation4]
                %s728 = scalar_lea.vmem %s710, %s726
              $region64: #{tpu_custom_call.1} parent=51 // loop_footer
                %s714 = sadd.s32 %s712, 1
              $region65: #{tpu_custom_call.1} parent=51 // loop_footer_branch
                %711 = sbr.rel target = $region61
              $region66: #{tpu_custom_call.1} parent=51 // loop_exit
                _
            $region52: #{tpu_custom_call.1} parent=43 // pred_fallthru
              _
          $region44: #{tpu_custom_call.1} parent=39 // pred_fallthru
            _
          %810 = vnop
        $region40: #{tpu_custom_call.1} parent=31 // pred_fallthru
          _
      $region32: #{tpu_custom_call.1} parent=5 // pred_fallthru
        _
      %p811 = scmp.le.s32.totalorder 2, %s12
      // Predicated region
      $region89: #{tpu_custom_call.1} parent=5 // pred_check
        %p812 = pneg %p811
      $region90: #{tpu_custom_call.1} parent=5 // pred_check_branch
        %814 = sbr.rel (%p812) target = $region92
      $region91: #{tpu_custom_call.1} parent=5 // pred_region
        %s815 = ssub.s32 %s12, 2
        // Predicated region
        $region93: #{tpu_custom_call.1} parent=91 // pred_check
          %p816 = pneg %p109
        $region94: #{tpu_custom_call.1} parent=91 // pred_check_branch
          %818 = sbr.rel (%p816) target = $region96
        $region95: #{tpu_custom_call.1} parent=91 // pred_region
          %s819 = sand.u32 %s94, 1
          %s820 = sand.u32 %s94, 1
          %s821 = smul.addr %s820, 136
          %s822 = scalar_lea.vmem [#allocation4], %s821
        $region96: #{tpu_custom_call.1} parent=91 // pred_fallthru
          _
      $region92: #{tpu_custom_call.1} parent=5 // pred_fallthru
        _
    $region6: #{tpu_custom_call.1} parent=1 // loop_footer
      %s16 = sadd.s32 1, %s12
    $region7: #{tpu_custom_call.1} parent=1 // loop_footer_branch
      %11 = sbr.rel target = $region3
    $region8: #{tpu_custom_call.1} parent=1 // loop_exit
      _
    %823 = vsyncpa [#allocation3], 1
    %s824 = scalar_lea.sflag [#allocation3], 1
    %825 = vsyncpa %s824, 1

</llo_original>
